<compile_context>
chip_gen: v7x
topology: tpu7x:2x2x1
jax: 0.10.0
libtpu: 0.0.40
codegen_flags: <defaults>
</compile_context>

<pallas_src>
import numpy as np
import jax
import jax.numpy as jnp
from jax.experimental import pallas as pl
from jax.experimental.pallas import tpu as pltpu

_MIB = 1024 * 1024


def _chip_plan():
    """Generation-aware block-size target, scoped-VMEM limit and core split."""
    kind = ""
    try:
        kind = jax.devices()[0].device_kind.lower()
    except Exception:
        pass
    is_v7 = ("v7" in kind) or ("7x" in kind)
    if is_v7:
        # 64 MiB physical VMEM/TC, 3.2 TB/s HBM, 2 TensorCores per chip.
        plan = dict(block_target=6 * _MIB, vmem_limit=48 * _MIB, splits=2)
    else:
        # v5e / v6e: 128 MiB VMEM, single TensorCore.
        plan = dict(block_target=8 * _MIB, vmem_limit=64 * _MIB, splits=1)
    try:  # refine against the actual physical VMEM if the query is available
        vmem_phys = int(pltpu.get_tpu_info().vmem_capacity_bytes)
        plan["vmem_limit"] = min(plan["vmem_limit"], (vmem_phys * 3) // 4)
    except Exception:
        pass
    return plan


def _plan_tile_n(rows, lanes, itemsize, masked, *, block_target, vmem_limit, buffers):
    """Largest row-tile that hits the per-input block byte target and fits VMEM."""
    packing = 8 * max(1, 4 // max(1, itemsize))          # 8 f32 / 16 bf16 / 32 int8 rows
    lanes_pad = -(-lanes // 128) * 128                   # VMEM lane padding
    row_bytes_data = 2 * lanes_pad * itemsize            # x + y, per pipeline buffer
    row_bytes_mask = 128 * 4 if masked else 0            # (tile_n,1) f32 mask lane-pads to 128
    row_bytes = row_bytes_data + row_bytes_mask

    tile_n = max(packing, block_target // max(1, lanes_pad * itemsize))
    slack = 6 * _MIB                                     # acc / out / internal scratch headroom
    budget = max(2 * _MIB, vmem_limit - slack)
    tile_n = min(tile_n, max(packing, budget // max(1, buffers * row_bytes)))

    rows_pad = -(-rows // packing) * packing
    tile_n = min(tile_n, rows_pad)
    return max(packing, (tile_n // packing) * packing)


def _make_kernel(rows, tile_n, steps_per_split, masked):
    """Masked / unmasked sum-of-squared-error kernel over (tile_n, lanes) blocks."""

    def body(x_ref, y_ref, m_ref, out_ref, acc_ref):
        k = pl.program_id(1)

        @pl.when(k == 0)
        def _():
            acc_ref[...] = jnp.zeros_like(acc_ref)

        # Logical (unclamped) block index -> global row index of each block row.
        block = pl.program_id(0) * steps_per_split + k
        row = block * tile_n + jax.lax.broadcasted_iota(jnp.int32, (tile_n, 1), 0)
        keep = row < rows                     # guards ragged tails AND overflow blocks
        if masked:
            keep = keep & (m_ref[...] > 0.0)

        diff = x_ref[...].astype(jnp.float32) - y_ref[...].astype(jnp.float32)
        # NOTE: keep the select (NaN/Inf-safe for garbage / unselected rows); do NOT
        # replace it with `diff * mask` — the kernel is DMA-bound anyway.
        sq = jnp.where(keep, diff * diff, 0.0)
        # Cheap sublane reduce in the hot loop; the cross-lane reduce is deferred
        # to the single epilogue below.
        acc_ref[...] += jnp.sum(sq, axis=0, keepdims=True)

        @pl.when(k == pl.num_programs(1) - 1)
        def _():
            out_ref[...] = jnp.zeros(out_ref.shape, jnp.float32) + jnp.sum(acc_ref[...])

    if masked:
        return body

    def body_unmasked(x_ref, y_ref, out_ref, acc_ref):
        return body(x_ref, y_ref, None, out_ref, acc_ref)

    return body_unmasked


def loss_func_mask_wrapper(inp, target, mask=None, *, tile_n=None, splits=None,
                           buffer_count=None):
    """Pallas equivalent of LossFuncMaskWrapper(nn.MSELoss())(input, target, mask).

    input/target: (N, *) arrays (any float dtype; streamed natively, upcast in-kernel).
    mask:         optional (N,) boolean batch mask -> loss over input[mask]/target[mask].
    """
    assert inp.shape == target.shape
    n_orig = inp.shape[0]
    d_orig = 1
    for s in inp.shape[1:]:
        d_orig *= int(s)
    x2 = inp.reshape(n_orig, d_orig)
    y2 = target.reshape(n_orig, d_orig)

    plan = _chip_plan()
    if splits is None:
        splits = plan["splits"]
    buffers = 2 if buffer_count is None else max(2, int(buffer_count))

    masked = mask is not None
    if masked:
        mask_b = jnp.reshape(mask, (n_orig,)).astype(bool)
        m_col = mask_b.astype(jnp.float32).reshape(n_orig, 1)
        rows, lanes = n_orig, d_orig
        xk, yk = x2, y2
    else:
        # Lane-dense folding: the unmasked loss is a plain elementwise reduction, so
        # fold rows so the last (lane) dim is a multiple of 128 when D is small.
        total = n_orig * d_orig
        lanes = d_orig
        for cand in (1024, 512, 256, 128):
            if total % cand == 0 and total // cand >= 8:
                lanes = cand
                break
        rows = total // lanes
        xk = x2.reshape(rows, lanes)
        yk = y2.reshape(rows, lanes)
        m_col = None

    itemsize = jnp.dtype(inp.dtype).itemsize
    if tile_n is None:
        tile_n = _plan_tile_n(rows, lanes, itemsize, masked,
                              block_target=plan["block_target"],
                              vmem_limit=plan["vmem_limit"], buffers=buffers)

    steps_total = -(-rows // tile_n)
    splits = max(1, min(int(splits), steps_total))
    steps_per_split = -(-steps_total // splits)

    def data_map(i, k):
        # Clamp overflow blocks (when splits does not divide steps_total) into range;
        # their contribution is zeroed in-kernel by the logical-row guard.
        return (jnp.minimum(i * steps_per_split + k, steps_total - 1), 0)

    spec_kwargs = {}
    if buffer_count is not None and int(buffer_count) != 2:
        spec_kwargs["pipeline_mode"] = pl.Buffered(int(buffer_count))

    in_specs = [pl.BlockSpec((tile_n, lanes), data_map, **spec_kwargs),
                pl.BlockSpec((tile_n, lanes), data_map, **spec_kwargs)]
    args = [xk, yk]
    if masked:
        in_specs.append(pl.BlockSpec((tile_n, 1), data_map))
        args.append(m_col)

    partials = pl.pallas_call(
        _make_kernel(rows, tile_n, steps_per_split, masked),
        out_shape=jax.ShapeDtypeStruct((splits, 8, 128), jnp.float32),
        grid=(splits, steps_per_split),
        in_specs=in_specs,
        out_specs=pl.BlockSpec((1, 8, 128), lambda i, k: (i, 0, 0)),
        scratch_shapes=[pltpu.VMEM((1, lanes), jnp.float32)],
        compiler_params=pltpu.CompilerParams(
            dimension_semantics=("parallel", "arbitrary"),
            vmem_limit_bytes=plan["vmem_limit"],
        ),
    )(*args)

    total_sq = jnp.sum(partials[:, 0, 0])

    # Two-factor divide (avoids int32 overflow of num_selected_rows * D); empty
    # selection gives 0/0 = NaN, matching torch's mean over an empty tensor.
    if masked:
        n_sel = jnp.sum(mask_b.astype(jnp.int32)).astype(jnp.float32)
        return (total_sq / jnp.float32(d_orig)) / n_sel
    return (total_sq / jnp.float32(d_orig)) / jnp.float32(n_orig)


if __name__ == "__main__":
    key = jax.random.PRNGKey(0)
    k1, k2, k3, k4, k5, k6, k7, k8 = jax.random.split(key, 8)

    # Case 1: small f32, masked + unmasked ((N, *) contract, D=32 lane-underfilled path).
    N, D = 8, 32
    x = jax.random.normal(k1, (N, D), dtype=jnp.float32)
    y = jax.random.normal(k2, (N, D), dtype=jnp.float32)
    mask = jax.random.bernoulli(k3, 0.5, (N,)).at[0].set(True)

    got_m = jax.block_until_ready(loss_func_mask_wrapper(x, y, mask))
    got_u = jax.block_until_ready(loss_func_mask_wrapper(x, y, None))
    xn, yn, mn = np.asarray(x), np.asarray(y), np.asarray(mask)
    assert np.allclose(np.asarray(got_m), np.mean((xn[mn] - yn[mn]) ** 2), rtol=1e-5, atol=1e-6)
    assert np.allclose(np.asarray(got_u), np.mean((xn - yn) ** 2), rtol=1e-5, atol=1e-6)

    # Case 2: multi-step grid + forced 2-way core split + ragged tail + overflow block.
    N2, D2 = 37, 128
    x2 = jax.random.normal(k4, (N2, D2), dtype=jnp.float32)
    y2 = jax.random.normal(k5, (N2, D2), dtype=jnp.float32)
    mask2 = jax.random.bernoulli(k6, 0.6, (N2,)).at[3].set(True)
    got2 = jax.block_until_ready(
        loss_func_mask_wrapper(x2, y2, mask2, tile_n=8, splits=2))
    x2n, y2n, m2n = np.asarray(x2), np.asarray(y2), np.asarray(mask2)
    assert np.allclose(np.asarray(got2), np.mean((x2n[m2n] - y2n[m2n]) ** 2),
                       rtol=1e-5, atol=1e-6)

    # Case 3: bf16, 3-D (N, *) input, masked, default (generation-aware) planning.
    xb = jax.random.normal(k7, (N2, 4, 32), dtype=jnp.float32).astype(jnp.bfloat16)
    yb = jax.random.normal(k8, (N2, 4, 32), dtype=jnp.float32).astype(jnp.bfloat16)
    got3 = jax.block_until_ready(loss_func_mask_wrapper(xb, yb, mask2))
    xbn = np.asarray(xb, np.float32).reshape(N2, -1)
    ybn = np.asarray(yb, np.float32).reshape(N2, -1)
    assert np.allclose(np.asarray(got3), np.mean((xbn[m2n] - ybn[m2n]) ** 2),
                       rtol=2e-2, atol=2e-2)

    # Case 4: unmasked with small D -> exercises the lane-dense fold (64*32 -> (8, 256)).
    N4, D4 = 64, 32
    x4 = jax.random.normal(k1, (N4, D4), dtype=jnp.float32)
    y4 = jax.random.normal(k2, (N4, D4), dtype=jnp.float32)
    got4 = jax.block_until_ready(loss_func_mask_wrapper(x4, y4, None))
    assert np.allclose(np.asarray(got4),
                       np.mean((np.asarray(x4) - np.asarray(y4)) ** 2),
                       rtol=1e-5, atol=1e-6)

    print("KERNEL_OK")
</pallas_src>

<mosaic_0001>
module attributes {stable_mosaic.version = 11 : i64} {
  func.func @body(%arg0: i32, %arg1: i32, %arg2: memref<8x32xf32, #tpu.memory_space<vmem>>, %arg3: memref<8x32xf32, #tpu.memory_space<vmem>>, %arg4: memref<8x1xf32, #tpu.memory_space<vmem>>, %arg5: memref<1x8x128xf32, #tpu.memory_space<vmem>>, %arg6: memref<1x32xf32, #tpu.memory_space<vmem>>) attributes {dimension_semantics = [#tpu.dimension_semantics<parallel>, #tpu.dimension_semantics<arbitrary>], iteration_bounds = array<i64: 1, 1>, scalar_prefetch = 0 : i64, scratch_operands = 1 : i64, tpu.core_type = #tpu.core_type<tc>, window_params = [{transform_indices = @transform_0, window_bounds = array<i64: 8, 32>}, {transform_indices = @transform_1, window_bounds = array<i64: 8, 32>}, {transform_indices = @transform_2, window_bounds = array<i64: 8, 1>}, {transform_indices = @transform_3, window_bounds = array<i64: 1, 8, 128>}]} {
    %c0_i32 = arith.constant 0 : i32
    %0 = arith.cmpi eq, %arg1, %c0_i32 : i32
    %1 = arith.extui %0 : i1 to i32
    %c0_i32_0 = arith.constant 0 : i32
    %2 = arith.cmpi ne, %1, %c0_i32_0 : i32
    scf.if %2 {
      %cst_15 = arith.constant 0.000000e+00 : f32
      %31 = vector.broadcast %cst_15 : f32 to vector<1x32xf32>
      %c0_16 = arith.constant 0 : index
      %c0_17 = arith.constant 0 : index
      %32 = vector.load %arg6[%c0_16, %c0_17] : memref<1x32xf32, #tpu.memory_space<vmem>>, vector<1x32xf32>
      tpu.vector_store %arg6[%c0_16, %c0_17], %31 {strides = array<i32>} : memref<1x32xf32, #tpu.memory_space<vmem>>, vector<1x32xf32>,
    } else {
    }
    %c1_i32 = arith.constant 1 : i32
    %3 = arith.muli %arg0, %c1_i32 : i32
    %4 = arith.addi %3, %arg1 : i32
    %c8_i32 = arith.constant 8 : i32
    %5 = arith.muli %4, %c8_i32 : i32
    %6 = tpu.iota {dimensions = array<i32: 0>} : vector<8x1xi32>
    %7 = vector.broadcast %5 : i32 to vector<8x1xi32>
    %8 = arith.addi %7, %6 : vector<8x1xi32>
    %c8_i32_1 = arith.constant 8 : i32
    %9 = vector.broadcast %c8_i32_1 : i32 to vector<8x1xi32>
    %10 = arith.cmpi slt, %8, %9 : vector<8x1xi32>
    %c0 = arith.constant 0 : index
    %c0_2 = arith.constant 0 : index
    %11 = vector.load %arg4[%c0, %c0_2] : memref<8x1xf32, #tpu.memory_space<vmem>>, vector<8x1xf32>
    %cst = arith.constant 0.000000e+00 : f32
    %12 = vector.broadcast %cst : f32 to vector<8x1xf32>
    %13 = arith.cmpf ogt, %11, %12 : vector<8x1xf32>
    %14 = arith.andi %10, %13 : vector<8x1xi1>
    %c0_3 = arith.constant 0 : index
    %c0_4 = arith.constant 0 : index
    %15 = vector.load %arg2[%c0_3, %c0_4] : memref<8x32xf32, #tpu.memory_space<vmem>>, vector<8x32xf32>
    %c0_5 = arith.constant 0 : index
    %c0_6 = arith.constant 0 : index
    %16 = vector.load %arg3[%c0_5, %c0_6] : memref<8x32xf32, #tpu.memory_space<vmem>>, vector<8x32xf32>
    %17 = arith.subf %15, %16 : vector<8x32xf32>
    %18 = arith.mulf %17, %17 : vector<8x32xf32>
    %cst_7 = arith.constant 0.000000e+00 : f32
    %19 = vector.shape_cast %14 : vector<8x1xi1> to vector<8x1xi1>
    %20 = vector.broadcast %19 : vector<8x1xi1> to vector<8x32xi1>
    %21 = vector.broadcast %cst_7 : f32 to vector<8x32xf32>
    %22 = arith.select %20, %18, %21 : vector<8x32xi1>, vector<8x32xf32>
    %c0_8 = arith.constant 0 : index
    %c0_9 = arith.constant 0 : index
    %23 = vector.load %arg6[%c0_8, %c0_9] : memref<1x32xf32, #tpu.memory_space<vmem>>, vector<1x32xf32>
    %cst_10 = arith.constant dense<0.000000e+00> : vector<32xf32>
    %24 = vector.multi_reduction <add>, %22, %cst_10 [0] : vector<8x32xf32> to vector<32xf32>
    %25 = vector.shape_cast %24 : vector<32xf32> to vector<1x32xf32>
    %26 = arith.addf %23, %25 : vector<1x32xf32>
    %c0_11 = arith.constant 0 : index
    %c0_12 = arith.constant 0 : index
    %27 = vector.load %arg6[%c0_11, %c0_12] : memref<1x32xf32, #tpu.memory_space<vmem>>, vector<1x32xf32>
    tpu.vector_store %arg6[%c0_11, %c0_12], %26 {strides = array<i32>} : memref<1x32xf32, #tpu.memory_space<vmem>>, vector<1x32xf32>,
    %c0_i32_13 = arith.constant 0 : i32
    %28 = arith.cmpi eq, %arg1, %c0_i32_13 : i32
    %29 = arith.extui %28 : i1 to i32
    %c0_i32_14 = arith.constant 0 : i32
    %30 = arith.cmpi ne, %29, %c0_i32_14 : i32
    scf.if %30 {
      %cst_15 = arith.constant 0.000000e+00 : f32
      %31 = vector.broadcast %cst_15 : f32 to vector<1x8x128xf32>
      %c0_16 = arith.constant 0 : index
      %c0_17 = arith.constant 0 : index
      %32 = vector.load %arg6[%c0_16, %c0_17] : memref<1x32xf32, #tpu.memory_space<vmem>>, vector<1x32xf32>
      %33 = vector.shape_cast %32 : vector<1x32xf32> to vector<1x1x32xf32>
      %cst_18 = arith.constant dense<0.000000e+00> : vector<1xf32>
      %34 = vector.multi_reduction <add>, %33, %cst_18 [1, 2] : vector<1x1x32xf32> to vector<1xf32>
      %35 = vector.shape_cast %34 : vector<1xf32> to vector<1x1x1xf32>
      %36 = vector.extract %35[0, 0, 0] : f32 from vector<1x1x1xf32>
      %37 = vector.broadcast %36 : f32 to vector<1x8x128xf32>
      %38 = arith.addf %31, %37 : vector<1x8x128xf32>
      %c0_19 = arith.constant 0 : index
      %c0_20 = arith.constant 0 : index
      %c0_21 = arith.constant 0 : index
      %39 = vector.load %arg5[%c0_19, %c0_20, %c0_21] : memref<1x8x128xf32, #tpu.memory_space<vmem>>, vector<1x8x128xf32>
      tpu.vector_store %arg5[%c0_19, %c0_20, %c0_21], %38 {strides = array<i32>} : memref<1x8x128xf32, #tpu.memory_space<vmem>>, vector<1x8x128xf32>,
    } else {
    }
    return
  }
  func.func @transform_0(%arg0: i32, %arg1: i32) -> (i32, i32) {
    %c1_i32 = arith.constant 1 : i32
    %0 = arith.muli %arg0, %c1_i32 : i32
    %1 = arith.addi %0, %arg1 : i32
    %c0_i32 = arith.constant 0 : i32
    %2 = arith.minsi %1, %c0_i32 : i32
    %c0_i32_0 = arith.constant 0 : i32
    %c0_i32_1 = arith.constant 0 : i32
    return %2, %c0_i32_0 : i32, i32
  }
  func.func @transform_1(%arg0: i32, %arg1: i32) -> (i32, i32) {
    %c1_i32 = arith.constant 1 : i32
    %0 = arith.muli %arg0, %c1_i32 : i32
    %1 = arith.addi %0, %arg1 : i32
    %c0_i32 = arith.constant 0 : i32
    %2 = arith.minsi %1, %c0_i32 : i32
    %c0_i32_0 = arith.constant 0 : i32
    %c0_i32_1 = arith.constant 0 : i32
    return %2, %c0_i32_0 : i32, i32
  }
  func.func @transform_2(%arg0: i32, %arg1: i32) -> (i32, i32) {
    %c1_i32 = arith.constant 1 : i32
    %0 = arith.muli %arg0, %c1_i32 : i32
    %1 = arith.addi %0, %arg1 : i32
    %c0_i32 = arith.constant 0 : i32
    %2 = arith.minsi %1, %c0_i32 : i32
    %c0_i32_0 = arith.constant 0 : i32
    %c0_i32_1 = arith.constant 0 : i32
    return %2, %c0_i32_0 : i32, i32
  }
  func.func @transform_3(%arg0: i32, %arg1: i32) -> (i32, i32, i32) {
    %c0_i32 = arith.constant 0 : i32
    %c0_i32_0 = arith.constant 0 : i32
    %c0_i32_1 = arith.constant 0 : i32
    return %arg0, %c0_i32, %c0_i32_0 : i32, i32, i32
  }
}

</mosaic_0001>

<llo_original>
// kernel: tpu_custom_call.1
$region0: #{tpu_custom_call.1}
  #allocation0 [shape = 'u32[]', space=smem, size = 0x4, offset = 0x4, fixed_abs, tag = 'smem constant byte address 0x4 - core index']
  #allocation1 [shape = 'u32[144,128]{1,0:T(1,128)}', space=vmem, size = 0x12000, scoped, tag = 'internal scratch']
  #allocation2 [shape = 'f32[1,32]{1,0:T(1,128)}', space=vmem, size = 0x200, scoped, tag = 'scratch operand']
  %s0 = inlined_call_operand.hbm [shape: f32[8,32], index: 0, kind: input, shape index: {}]
  %s1 = inlined_call_operand.hbm [shape: f32[8,32], index: 1, kind: input, shape index: {}]
  %s2 = inlined_call_operand.hbm [shape: f32[8,1], index: 2, kind: input, shape index: {}]
  %s3 = inlined_call_operand.hbm [shape: f32[1,8,128], index: 3, kind: output, shape index: {}]
  %s4 = sld [smem:[#allocation0]]
  $region42: #{tpu_custom_call.1} parent=0
    _
  %s6 = ssub.s32 1, %s4
  %s7 = scalar_select 0, %s6, %s4
  $region1: #{tpu_custom_call.1} parent=0
    #allocation3 [shape = 'u8[4096]{0}', space=vmem, size = 0x1000, scoped, tag = 'input window, operand 0, single buffered']
    #allocation4 [shape = 's32[1]{0}', space=sflag, size = 0x4, scoped, tag = 'scoped memory for tpu_custom_call.1']
    #allocation5 [shape = 's32[1]{0}', space=sflag, size = 0x4, scoped, tag = 'scoped memory for tpu_custom_call.1']
    #allocation6 [shape = 'u8[4096]{0}', space=vmem, size = 0x1000, scoped, tag = 'input window, operand 1, single buffered']
    #allocation7 [shape = 's32[1]{0}', space=sflag, size = 0x4, scoped, tag = 'scoped memory for tpu_custom_call.1']
    #allocation8 [shape = 'u8[4096]{0}', space=vmem, size = 0x1000, scoped, tag = 'input window, operand 2, single buffered']
    #allocation9 [shape = 'u8[4096]{0}', space=vmem, size = 0x1000, scoped, tag = 'output window, operand 0, single buffered']
    %8 = vsyncpa [#allocation4], 0
    %9 = vsyncpa [#allocation7], 0
    %10 = vsyncpa [#allocation5], 0
    // Predicated region
    $region2: #{tpu_custom_call.1} parent=1 // pred_check
      _
    $region3: #{tpu_custom_call.1} parent=1 // pred_check_branch
      %12 = sbr.rel (0) target = $region5
    $region4: #{tpu_custom_call.1} parent=1 // pred_region
      %s13 = sadd.s32 0, 0
      %p14 = scmp.lt.s32.totalorder %s13, 0
      %s15 = scalar_select %p14, %s13, 0
      %s17 = ssub.s32 128, 128
      %18 = vsyncadd [#allocation4], %s17
      %s19 = smul.addr %s15, 128
      %s20 = scalar_lea.hbm %s0, %s19
      %s22 = sshll.u32 [#allocation3], 4
      %s23 = int_to_ptr.vmem [resolvable:$true] %s22
      %25 = dma.hbm_to_vmem [thread:$0]  %s20, 128, %s23, [#allocation4]
    $region5: #{tpu_custom_call.1} parent=1 // pred_fallthru
      _
    // Predicated region
    $region6: #{tpu_custom_call.1} parent=1 // pred_check
      _
    $region7: #{tpu_custom_call.1} parent=1 // pred_check_branch
      %27 = sbr.rel (0) target = $region9
    $region8: #{tpu_custom_call.1} parent=1 // pred_region
      %s28 = sadd.s32 0, 0
      %p29 = scmp.lt.s32.totalorder %s28, 0
      %s30 = scalar_select %p29, %s28, 0
      %s32 = ssub.s32 128, 128
      %33 = vsyncadd [#allocation7], %s32
      %s34 = smul.addr %s30, 128
      %s35 = scalar_lea.hbm %s1, %s34
      %s37 = sshll.u32 [#allocation6], 4
      %s38 = int_to_ptr.vmem [resolvable:$true] %s37
      %40 = dma.hbm_to_vmem [thread:$0]  %s35, 128, %s38, [#allocation7]
    $region9: #{tpu_custom_call.1} parent=1 // pred_fallthru
      _
    // Predicated region
    $region10: #{tpu_custom_call.1} parent=1 // pred_check
      _
    $region11: #{tpu_custom_call.1} parent=1 // pred_check_branch
      %42 = sbr.rel (0) target = $region13
    $region12: #{tpu_custom_call.1} parent=1 // pred_region
      %s43 = sadd.s32 0, 0
      %p44 = scmp.lt.s32.totalorder %s43, 0
      %s45 = scalar_select %p44, %s43, 0
      %s47 = ssub.s32 128, 128
      %48 = vsyncadd [#allocation7], %s47
      %s49 = smul.addr %s45, 128
      %s50 = scalar_lea.hbm %s2, %s49
      %s52 = sshll.u32 [#allocation8], 4
      %s53 = int_to_ptr.vmem [resolvable:$true] %s52
      %55 = dma.hbm_to_vmem [thread:$0]  %s50, 128, %s53, [#allocation7]
    $region13: #{tpu_custom_call.1} parent=1 // pred_fallthru
      _
    // Predicated region
    $region14: #{tpu_custom_call.1} parent=1 // pred_check
      _
    $region15: #{tpu_custom_call.1} parent=1 // pred_check_branch
      %57 = sbr.rel (0) target = $region17
    $region16: #{tpu_custom_call.1} parent=1 // pred_region
      %58 = dma.done [#allocation4], 128
    $region17: #{tpu_custom_call.1} parent=1 // pred_fallthru
      _
    // Predicated region
    $region18: #{tpu_custom_call.1} parent=1 // pred_check
      _
    $region19: #{tpu_custom_call.1} parent=1 // pred_check_branch
      %60 = sbr.rel (0) target = $region21
    $region20: #{tpu_custom_call.1} parent=1 // pred_region
      %61 = dma.done [#allocation7], 128
    $region21: #{tpu_custom_call.1} parent=1 // pred_fallthru
      _
    // Predicated region
    $region22: #{tpu_custom_call.1} parent=1 // pred_check
      _
    $region23: #{tpu_custom_call.1} parent=1 // pred_check_branch
      %63 = sbr.rel (0) target = $region25
    $region24: #{tpu_custom_call.1} parent=1 // pred_region
      %64 = dma.done [#allocation7], 128
    $region25: #{tpu_custom_call.1} parent=1 // pred_fallthru
      _
    %s65 = sadd.s32 0, 0
    %p66 = scmp.lt.s32.totalorder %s65, 0
    %s67 = scalar_select %p66, %s65, 0
    %s68 = sadd.s32 0, 0
    %p69 = scmp.lt.s32.totalorder %s68, 0
    %s70 = scalar_select %p69, %s68, 0
    %s71 = sadd.s32 0, 0
    %p72 = scmp.lt.s32.totalorder %s71, 0
    %s73 = scalar_select %p72, %s71, 0
    %p74 = scmp.eq.s32.totalorder 0, 0
    // Predicated region
    $region26: #{tpu_custom_call.1} parent=1 // pred_check
      %p75 = pneg %p74
    $region27: #{tpu_custom_call.1} parent=1 // pred_check_branch
      %77 = sbr.rel (%p75) target = $region29
    $region28: #{tpu_custom_call.1} parent=1 // pred_region
      %vm78 = vcmask 253952
      %79 = vst.msk [vmem:[#allocation2] sm:$0x1] %vm78, 0.0
    $region29: #{tpu_custom_call.1} parent=1 // pred_fallthru
      _
    %s80 = sadd.s32 0, 0
    %s81 = smul.u32 %s80, 8
    %v82 = vlaneseq
    %v83 = vshrl.u32 %v82, 7
    %v84 = vstv %s81
    %v85 = vadd.s32 %v84, %v83
    %vm86 = vcmp.lt.s32.totalorder %v85, 8
    %v87 = vld [vmem:[#allocation8] sm:$0xff]
    %vm88 = vcmp.gt.f32.partialorder %v87, 0.0
    %vm89 = vmand %vm86, %vm88
    %v90 = vld [vmem:[#allocation3] sm:$0xff]
    %v91 = vld [vmem:[#allocation6] sm:$0xff]
    %v92 = vsub.f32 %v90, %v91
    %v93 = vmul.f32 %v92, %v92
    %v94 = vsel %vm89, 1, 0
    %95 = vset.pattern.permute.xlu0 0
    %96 = vperm.xlu0 %95, %v94
    %v97 = vpop.permute.xlu0 %96
    %vm98 = vcmp.eq.s32.totalorder %v97, 1
    %v99 = vsel %vm98, %v93, 0.0
    %v100 = vld [vmem:[#allocation2] sm:$0x1]
    %vm101 = vcmask 261120
    %v102 = vsel %vm101, %v99, 0.0
    %v103 = vrot.slane %v102, 4
    %v104 = vadd.f32 %v102, %v103
    %v105 = vrot.slane %v104, 2
    %v106 = vadd.f32 %v104, %v105
    %v107 = vrot.slane %v106, 1
    %v108 = vadd.f32 %v106, %v107
    %v109 = vadd.f32 %v100, %v108
    %vm110 = vcmask 253952
    %111 = vst.msk [vmem:[#allocation2] sm:$0x1] %vm110, %v109
    // Predicated region
    $region30: #{tpu_custom_call.1} parent=1 // pred_check
      %p112 = pneg %p74
    $region31: #{tpu_custom_call.1} parent=1 // pred_check_branch
      %114 = sbr.rel (%p112) target = $region33
    $region32: #{tpu_custom_call.1} parent=1 // pred_region
      %v115 = vld [vmem:[#allocation2] sm:$0x1]
      %v116 = vsel %vm110, %v115, 0.0
      %117 = vadd.xlane.f32.xlu0 %v116
      %v118 = vpop.xlane.xlu0 %117
      %v119 = vrot.slane %v118, 4
      %v120 = vadd.f32 %v118, %v119
      %v121 = vrot.slane %v120, 2
      %v122 = vadd.f32 %v120, %v121
      %v123 = vrot.slane %v122, 1
      %v124 = vadd.f32 %v122, %v123
      %s125 = vtos %v124
      %v126 = vstv %s125
      %v127 = vadd.f32 %v126, 0.0
      %128 = vst [vmem:[#allocation9] sm:$0xff] %v127
    $region33: #{tpu_custom_call.1} parent=1 // pred_fallthru
      _
    // Predicated region
    $region34: #{tpu_custom_call.1} parent=1 // pred_check
      _
    $region35: #{tpu_custom_call.1} parent=1 // pred_check_branch
      %130 = sbr.rel (0) target = $region37
    $region36: #{tpu_custom_call.1} parent=1 // pred_region
      %s132 = ssub.s32 128, 128
      %133 = vsyncadd [#allocation5], %s132
      %s135 = sshll.u32 [#allocation9], 4
      %s136 = int_to_ptr.vmem [resolvable:$true] %s135
      %138 = dma.vmem_to_hbm [thread:$0]  %s136, 128, %s3, [#allocation5]
    $region37: #{tpu_custom_call.1} parent=1 // pred_fallthru
      _
    // Predicated region
    $region38: #{tpu_custom_call.1} parent=1 // pred_check
      _
    $region39: #{tpu_custom_call.1} parent=1 // pred_check_branch
      %140 = sbr.rel (0) target = $region41
    $region40: #{tpu_custom_call.1} parent=1 // pred_region
      %141 = dma.done [#allocation5], 128
    $region41: #{tpu_custom_call.1} parent=1 // pred_fallthru
      _
    %142 = vsyncpa [#allocation4], 1
    %143 = vsyncpa [#allocation7], 1
    %144 = vsyncpa [#allocation5], 1

</llo_original>
